<compile_context>
chip_gen: v5e
topology: v5e:2x2
jax: 0.10.0
libtpu: 0.0.40
codegen_flags: <defaults>
</compile_context>

<pallas_src>
import functools

import jax
import jax.numpy as jnp
from jax.experimental import pallas as pl
from jax.experimental.pallas import tpu as pltpu


def _round_up(v: int, m: int) -> int:
    return ((v + m - 1) // m) * m


# itemsize -> required sublane multiple for the second-to-last block dim.
_SUBLANE = {4: 8, 2: 16, 1: 32}


def _tile_defaults():
    """Per-generation tile / VMEM-limit defaults for bf16 compute."""
    try:
        kind = jax.devices()[0].device_kind.lower()
    except Exception:  # pragma: no cover - defensive
        kind = ""
    if "v7" in kind:
        # 64 MiB VMEM per TC, ~3.2 TB/s HBM: 1024x1024 output tiles already
        # reach the compute roofline; keep footprint well under 64 MiB and
        # make sure the parallel N axis has >= 2 blocks for the 2 TensorCores.
        return dict(tm=1024, tn=1024, tk=1024, vmem=48 * 1024 * 1024, two_cores=True)
    if "v6" in kind:
        # 918 TF/s vs ~1.4 TB/s: needs ~2048x1024 output tiles to be MXU-bound.
        return dict(tm=2048, tn=1024, tk=2048, vmem=96 * 1024 * 1024, two_cores=False)
    if "v5" in kind:
        # 197 TF/s vs ~0.82 TB/s: compute-bound already at 512x512 output
        # tiles; raise the 16 MiB scoped-VMEM default anyway for headroom.
        return dict(tm=512, tn=512, tk=1024, vmem=64 * 1024 * 1024, two_cores=False)
    # Unknown chip: conservative tiles that fit any scoped-VMEM default.
    return dict(tm=512, tn=512, tk=1024, vmem=None, two_cores=False)


# ----------------------------------------------------------------------------
# Kernels
# ----------------------------------------------------------------------------
def _kernel_single_k(x_ref, w_ref, b_ref, o_ref):
    # Full-K panels fit in VMEM: one dot, no accumulator, no init/finalize.
    acc = jnp.dot(x_ref[...], w_ref[...], preferred_element_type=jnp.float32)
    o_ref[...] = (acc + b_ref[...].astype(jnp.float32)).astype(o_ref.dtype)


def _kernel_kloop_f32_out(x_ref, w_ref, b_ref, o_ref):
    # f32 output block is resident across the K axis: accumulate in place,
    # saving the tm*tn*4B scratch and the finalize copy.
    k = pl.program_id(2)
    part = jnp.dot(x_ref[...], w_ref[...], preferred_element_type=jnp.float32)

    @pl.when(k == 0)
    def _init():
        o_ref[...] = b_ref[...].astype(jnp.float32) + part

    @pl.when(k > 0)
    def _accum():
        o_ref[...] += part


def _kernel_kloop_acc(x_ref, w_ref, b_ref, o_ref, acc_ref):
    # Low-precision output: accumulate in an f32 VMEM scratch, cast once.
    k = pl.program_id(2)

    @pl.when(k == 0)
    def _init():
        acc_ref[...] = jnp.zeros_like(acc_ref)

    acc_ref[...] += jnp.dot(
        x_ref[...], w_ref[...], preferred_element_type=jnp.float32
    )

    @pl.when(k == pl.num_programs(2) - 1)
    def _finalize():
        o_ref[...] = (acc_ref[...] + b_ref[...].astype(jnp.float32)).astype(
            o_ref.dtype
        )


# ----------------------------------------------------------------------------
# Pallas call
# ----------------------------------------------------------------------------
@functools.partial(
    jax.jit,
    static_argnames=(
        "tm", "tn", "tk", "num_classes", "out_dtype", "compute_dtype", "vmem_limit",
    ),
)
def _linear_pallas(x, w_t, b2d, *, tm, tn, tk, num_classes, out_dtype,
                   compute_dtype, vmem_limit):
    """x: (B, D); w_t: (D_pad, C_pad) pre-transposed/padded; b2d: (1, C_pad) f32."""
    B, D = x.shape
    D_pad, C_pad = w_t.shape
    B_pad = _round_up(B, tm)

    x = x.astype(compute_dtype)
    if (B_pad, D_pad) != (B, D):
        # Zero padding is contraction-safe; padded rows are sliced off below.
        x = jnp.pad(x, ((0, B_pad - B), (0, D_pad - D)))

    gm, gn, gk = B_pad // tm, C_pad // tn, D_pad // tk

    comp_size = jnp.dtype(compute_dtype).itemsize
    out_size = jnp.dtype(out_dtype).itemsize
    cost = pl.CostEstimate(
        flops=2 * B_pad * C_pad * D_pad,
        transcendentals=0,
        bytes_accessed=(
            B_pad * D_pad * comp_size * gn        # x re-streamed once per N block
            + D_pad * C_pad * comp_size * gm      # W re-streamed once per M block
            + C_pad * 4 * gm                      # bias
            + B_pad * C_pad * out_size            # output written once
        ),
    )

    if gk == 1:
        # Single K block: drop the K grid axis, the accumulator and pl.when.
        grid = (gm, gn)
        kernel = _kernel_single_k
        in_specs = [
            pl.BlockSpec((tm, tk), lambda i, j: (i, 0)),   # x panel
            pl.BlockSpec((tk, tn), lambda i, j: (0, j)),   # W^T panel
            pl.BlockSpec((1, tn), lambda i, j: (0, j)),    # bias tile
        ]
        out_specs = pl.BlockSpec((tm, tn), lambda i, j: (i, j))
        scratch = []
        dim_sem = ("parallel", "parallel")
    else:
        grid = (gm, gn, gk)
        in_specs = [
            pl.BlockSpec((tm, tk), lambda i, j, k: (i, k)),
            pl.BlockSpec((tk, tn), lambda i, j, k: (k, j)),
            pl.BlockSpec((1, tn), lambda i, j, k: (0, j)),
        ]
        out_specs = pl.BlockSpec((tm, tn), lambda i, j, k: (i, j))
        dim_sem = ("parallel", "parallel", "arbitrary")
        if jnp.dtype(out_dtype) == jnp.float32:
            kernel = _kernel_kloop_f32_out
            scratch = []
        else:
            kernel = _kernel_kloop_acc
            scratch = [pltpu.VMEM((tm, tn), jnp.float32)]

    cp_kwargs = dict(dimension_semantics=dim_sem)
    if vmem_limit is not None:
        cp_kwargs["vmem_limit_bytes"] = vmem_limit

    out = pl.pallas_call(
        kernel,
        out_shape=jax.ShapeDtypeStruct((B_pad, C_pad), out_dtype),
        grid_spec=pltpu.PrefetchScalarGridSpec(
            num_scalar_prefetch=0,
            grid=grid,
            in_specs=in_specs,
            out_specs=out_specs,
            scratch_shapes=scratch,
        ),
        compiler_params=pltpu.CompilerParams(**cp_kwargs),
        cost_estimate=cost,
    )(x, w_t, b2d)

    return out[:B, :num_classes]


# ----------------------------------------------------------------------------
# Wrappers
# ----------------------------------------------------------------------------
def make_single_linear(weight, bias, *, compute_dtype=jnp.bfloat16, out_dtype=None):
    """Prepare nn.Linear params once (transpose + pad + cast), return x -> y.

    weight: (num_classes, input_size) in PyTorch layout; bias: (num_classes,).
    The one-time prep hoists the weight transpose/pad/cast out of the per-call
    path so it is not re-materialized in HBM on every forward call.
    """
    C, D = weight.shape
    out_dtype = jnp.dtype(out_dtype if out_dtype is not None else weight.dtype)
    cfg = _tile_defaults()
    sub = _SUBLANE[jnp.dtype(compute_dtype).itemsize]

    tn = min(cfg["tn"], _round_up(C, 128))
    tk = min(cfg["tk"], _round_up(D, 128))

    # v7x megacore: prefer >= 2 blocks along the parallel N axis when possible
    # so both TensorCores get work even when B fits in a single M block.
    if cfg["two_cores"] and C > 128 and _round_up(C, 128) // tn < 2:
        tn = _round_up(-(-C // 2), 128)

    C_pad = _round_up(C, tn)
    D_pad = _round_up(D, tk)

    # One-time transpose so the weight lane axis is the output axis C
    # (lane-dense, canonical MXU tiling), then pad + cast for the MXU bf16 path.
    w_t = jnp.asarray(weight).T.astype(compute_dtype)            # (D, C)
    w_t = jnp.pad(w_t, ((0, D_pad - D), (0, C_pad - C)))
    b2d = jnp.pad(jnp.asarray(bias, jnp.float32).reshape(1, C),
                  ((0, 0), (0, C_pad - C)))

    def apply(x):
        B = x.shape[0]
        tm = min(cfg["tm"], _round_up(B, sub))                   # dtype-aware clamp
        return _linear_pallas(
            x, w_t, b2d,
            tm=tm, tn=tn, tk=tk, num_classes=C,
            out_dtype=out_dtype, compute_dtype=compute_dtype,
            vmem_limit=cfg["vmem"],
        )

    return apply


def single_linear(x, weight, bias, **kwargs):
    """Convenience one-shot wrapper (prep cost paid per call)."""
    return make_single_linear(weight, bias, **kwargs)(x)


if __name__ == "__main__":
    input_size = 32
    num_classes = 16
    batch = 8

    key = jax.random.PRNGKey(0)
    kx, kw, kb = jax.random.split(key, 3)

    # Deterministic PyTorch-like init: uniform(-1/sqrt(D), 1/sqrt(D)).
    bound = 1.0 / jnp.sqrt(jnp.float32(input_size))
    weight = jax.random.uniform(
        kw, (num_classes, input_size), jnp.float32, -bound, bound
    )
    bias = jax.random.uniform(kb, (num_classes,), jnp.float32, -bound, bound)
    x = jax.random.normal(kx, (batch, input_size), jnp.float32)

    linear = make_single_linear(weight, bias)     # one-time param prep
    out = linear(x)
    jax.block_until_ready(out)

    # Correctness check (bf16 MXU inputs, f32 accumulation -> relaxed tol).
    ref = x @ weight.T + bias
    assert out.shape == (batch, num_classes)
    assert jnp.allclose(out, ref, atol=2e-2, rtol=2e-2), (
        float(jnp.max(jnp.abs(out - ref)))
    )

    print("KERNEL_OK")
</pallas_src>

<mosaic_0001>
module attributes {stable_mosaic.version = 11 : i64} {
  func.func @_kernel_single_k(%arg0: i32, %arg1: i32, %arg2: memref<16x128xbf16, #tpu.memory_space<vmem>>, %arg3: memref<128x128xbf16, #tpu.memory_space<vmem>>, %arg4: memref<1x128xf32, #tpu.memory_space<vmem>>, %arg5: memref<16x128xf32, #tpu.memory_space<vmem>>) attributes {dimension_semantics = [#tpu.dimension_semantics<parallel>, #tpu.dimension_semantics<parallel>], iteration_bounds = array<i64: 1, 1>, scalar_prefetch = 0 : i64, scratch_operands = 0 : i64, tpu.core_type = #tpu.core_type<tc>, window_params = [{transform_indices = @transform_0, window_bounds = array<i64: 16, 128>}, {transform_indices = @transform_1, window_bounds = array<i64: 128, 128>}, {transform_indices = @transform_2, window_bounds = array<i64: 1, 128>}, {transform_indices = @transform_3, window_bounds = array<i64: 16, 128>}]} {
    %c0 = arith.constant 0 : index
    %c0_0 = arith.constant 0 : index
    %0 = vector.load %arg2[%c0, %c0_0] : memref<16x128xbf16, #tpu.memory_space<vmem>>, vector<16x128xbf16>
    %c0_1 = arith.constant 0 : index
    %c0_2 = arith.constant 0 : index
    %1 = vector.load %arg3[%c0_1, %c0_2] : memref<128x128xbf16, #tpu.memory_space<vmem>>, vector<128x128xbf16>
    %cst = arith.constant dense<0.000000e+00> : vector<16x128xf32>
    %2 = tpu.matmul %0, %1, %cst {dimension_numbers = #tpu.dot_dimension_numbers<[1], [0], [0], [1], [0, 0, 1, 1], [], []>} : vector<16x128xbf16>, vector<128x128xbf16>, vector<16x128xf32> -> vector<16x128xf32>
    %c0_3 = arith.constant 0 : index
    %c0_4 = arith.constant 0 : index
    %3 = vector.load %arg4[%c0_3, %c0_4] : memref<1x128xf32, #tpu.memory_space<vmem>>, vector<1x128xf32>
    %4 = vector.broadcast %3 : vector<1x128xf32> to vector<16x128xf32>
    %5 = arith.addf %2, %4 : vector<16x128xf32>
    %c0_5 = arith.constant 0 : index
    %c0_6 = arith.constant 0 : index
    %6 = vector.load %arg5[%c0_5, %c0_6] : memref<16x128xf32, #tpu.memory_space<vmem>>, vector<16x128xf32>
    tpu.vector_store %arg5[%c0_5, %c0_6], %5 {strides = array<i32>} : memref<16x128xf32, #tpu.memory_space<vmem>>, vector<16x128xf32>,
    return
  }
  func.func @transform_0(%arg0: i32, %arg1: i32) -> (i32, i32) {
    %c0_i32 = arith.constant 0 : i32
    %c0_i32_0 = arith.constant 0 : i32
    return %arg0, %c0_i32 : i32, i32
  }
  func.func @transform_1(%arg0: i32, %arg1: i32) -> (i32, i32) {
    %c0_i32 = arith.constant 0 : i32
    %c0_i32_0 = arith.constant 0 : i32
    return %c0_i32, %arg1 : i32, i32
  }
  func.func @transform_2(%arg0: i32, %arg1: i32) -> (i32, i32) {
    %c0_i32 = arith.constant 0 : i32
    %c0_i32_0 = arith.constant 0 : i32
    return %c0_i32, %arg1 : i32, i32
  }
  func.func @transform_3(%arg0: i32, %arg1: i32) -> (i32, i32) {
    %c0_i32 = arith.constant 0 : i32
    return %arg0, %arg1 : i32, i32
  }
}

</mosaic_0001>

<llo_original>
// kernel: _linear_pallas.1
$region0: #{_linear_pallas.1}
  #allocation0 [shape = 'u32[]', space=smem, size = 0x4, offset = 0x4, fixed_abs, tag = 'smem constant byte address 0x4 - core index']
  #allocation1 [shape = 'u32[72,128]{1,0:T(1,128)}', space=vmem, size = 0x9000, scoped, tag = 'internal scratch']
  %s0 = inlined_call_operand.vmem [shape: bf16[16,128], index: 0, kind: input, shape index: {}]
  %s1 = inlined_call_operand.hbm [shape: bf16[128,128], index: 1, kind: input, shape index: {}]
  %s2 = inlined_call_operand.vmem [shape: f32[1,128], index: 2, kind: input, shape index: {}]
  %s3 = inlined_call_operand.vmem [shape: f32[16,128], index: 3, kind: output, shape index: {}]
  %s4 = sld [smem:[#allocation0]]
  $region26: #{_linear_pallas.1} parent=0
    _
  %s6 = ssub.s32 1, %s4
  %s7 = scalar_select 0, %s6, %s4
  $region1: #{_linear_pallas.1} parent=0
    #allocation2 [shape = 'u8[32768]{0}', space=vmem, size = 0x8000, scoped, tag = 'input window, operand 1, single buffered']
    #allocation3 [shape = 's32[1]{0}', space=sflag, size = 0x4, scoped, tag = 'scoped memory for _linear_pallas.1']
    %8 = vsyncpa [#allocation3], 0
    // Predicated region
    $region2: #{_linear_pallas.1} parent=1 // pred_check
      _
    $region3: #{_linear_pallas.1} parent=1 // pred_check_branch
      %10 = sbr.rel (0) target = $region5
    $region4: #{_linear_pallas.1} parent=1 // pred_region
      _
    $region5: #{_linear_pallas.1} parent=1 // pred_fallthru
      _
    // Predicated region
    $region6: #{_linear_pallas.1} parent=1 // pred_check
      _
    $region7: #{_linear_pallas.1} parent=1 // pred_check_branch
      %12 = sbr.rel (0) target = $region9
    $region8: #{_linear_pallas.1} parent=1 // pred_region
      %14 = vsyncadd [#allocation3], 0
      %s15 = sshll.u32 %s1, 4
      %s16 = int_to_ptr.hbm [resolvable:$true] %s15
      %s17 = sshll.u32 [#allocation2], 4
      %s18 = int_to_ptr.vmem [resolvable:$true] %s17
      %23 = dma.hbm_to_vmem [thread:$0]  %s16, 1024, %s18, [#allocation3], 64, 64, 4
    $region9: #{_linear_pallas.1} parent=1 // pred_fallthru
      _
    // Predicated region
    $region10: #{_linear_pallas.1} parent=1 // pred_check
      _
    $region11: #{_linear_pallas.1} parent=1 // pred_check_branch
      %25 = sbr.rel (0) target = $region13
    $region12: #{_linear_pallas.1} parent=1 // pred_region
      _
    $region13: #{_linear_pallas.1} parent=1 // pred_fallthru
      _
    // Predicated region
    $region14: #{_linear_pallas.1} parent=1 // pred_check
      _
    $region15: #{_linear_pallas.1} parent=1 // pred_check_branch
      %27 = sbr.rel (0) target = $region17
    $region16: #{_linear_pallas.1} parent=1 // pred_region
      %29 = dma.done [#allocation3], 1024
    $region17: #{_linear_pallas.1} parent=1 // pred_fallthru
      _
    %v30 = vld [vmem:[%s0] sm:$0xf]
    %v31 = vld [vmem:[%s0 + $0x4] sm:$0xf]
    %v32 = vld [vmem:[#allocation2] sm:$0xf]
    %v33 = vld [vmem:[#allocation2 + $0x4] sm:$0xf]
    %v34 = vld [vmem:[#allocation2 + $0x8] sm:$0xf]
    %v35 = vld [vmem:[#allocation2 + $0xc] sm:$0xf]
    %v36 = vld [vmem:[#allocation2 + $0x10] sm:$0xf]
    %v37 = vld [vmem:[#allocation2 + $0x14] sm:$0xf]
    %v38 = vld [vmem:[#allocation2 + $0x18] sm:$0xf]
    %v39 = vld [vmem:[#allocation2 + $0x1c] sm:$0xf]
    %v40 = vld [vmem:[#allocation2 + $0x20] sm:$0xf]
    %v41 = vld [vmem:[#allocation2 + $0x24] sm:$0xf]
    %v42 = vld [vmem:[#allocation2 + $0x28] sm:$0xf]
    %v43 = vld [vmem:[#allocation2 + $0x2c] sm:$0xf]
    %v44 = vld [vmem:[#allocation2 + $0x30] sm:$0xf]
    %v45 = vld [vmem:[#allocation2 + $0x34] sm:$0xf]
    %v46 = vld [vmem:[#allocation2 + $0x38] sm:$0xf]
    %v47 = vld [vmem:[#allocation2 + $0x3c] sm:$0xf]
    %v48 = vld [vmem:[%s2] sm:$0x1]
    %v50 = vperm.slane %v48, 0
    %v54 = vunpack.c.l.b16 %v30
    %v55 = vunpack.c.l.b16 %v31
    %v56 = vpack.c.b16 %v55, %v54
    %v74 = vunpack.c.l.b16 %v32
    %v75 = vunpack.c.l.b16 %v33
    %v76 = vunpack.c.l.b16 %v34
    %v77 = vunpack.c.l.b16 %v35
    %v78 = vunpack.c.l.b16 %v36
    %v79 = vunpack.c.l.b16 %v37
    %v80 = vunpack.c.l.b16 %v38
    %v81 = vunpack.c.l.b16 %v39
    %v82 = vunpack.c.l.b16 %v40
    %v83 = vunpack.c.l.b16 %v41
    %v84 = vunpack.c.l.b16 %v42
    %v85 = vunpack.c.l.b16 %v43
    %v86 = vunpack.c.l.b16 %v44
    %v87 = vunpack.c.l.b16 %v45
    %v88 = vunpack.c.l.b16 %v46
    %v89 = vunpack.c.l.b16 %v47
    %v90 = vpack.c.b16 %v75, %v74
    %v91 = vpack.c.b16 %v77, %v76
    %v92 = vpack.c.b16 %v79, %v78
    %v93 = vpack.c.b16 %v81, %v80
    %v94 = vpack.c.b16 %v83, %v82
    %v95 = vpack.c.b16 %v85, %v84
    %v96 = vpack.c.b16 %v87, %v86
    %v97 = vpack.c.b16 %v89, %v88
    %106 = vmatpush.bf16.msra.mxu0 %v97
    %107 = vmatpush.bf16.msra.mxu0 %v96
    %108 = vmatpush.bf16.msra.mxu0 %v95
    %109 = vmatpush.bf16.msra.mxu0 %v94
    %110 = vmatpush.bf16.msra.mxu0 %v93
    %111 = vmatpush.bf16.msra.mxu0 %v92
    %112 = vmatpush.bf16.msra.mxu0 %v91
    %113 = vmatpush.bf16.msra.mxu0 %v90
    %114 = vmatmul.bf16.gmra.mxu0 %v56
    %v115 = vpop.f32.mrf.mxu0
    %v116 = vadd.f32 %v50, %v115
    %v117 = vpop.f32.mrf.mxu0
    %v118 = vadd.f32 %v50, %v117
    %119 = vdwg.mxu0
    %120 = vst [vmem:[%s3] sm:$0xff] %v116
    %121 = vst [vmem:[%s3 + $0x8] sm:$0xff] %v118
    // Predicated region
    $region18: #{_linear_pallas.1} parent=1 // pred_check
      _
    $region19: #{_linear_pallas.1} parent=1 // pred_check_branch
      %123 = sbr.rel (0) target = $region21
    $region20: #{_linear_pallas.1} parent=1 // pred_region
      _
    $region21: #{_linear_pallas.1} parent=1 // pred_fallthru
      _
    // Predicated region
    $region22: #{_linear_pallas.1} parent=1 // pred_check
      _
    $region23: #{_linear_pallas.1} parent=1 // pred_check_branch
      %125 = sbr.rel (0) target = $region25
    $region24: #{_linear_pallas.1} parent=1 // pred_region
      _
    $region25: #{_linear_pallas.1} parent=1 // pred_fallthru
      _
    %126 = vsyncpa [#allocation3], 1

</llo_original>
